<compile_context>
chip_gen: v5e
topology: v5e:2x2
jax: 0.10.0
libtpu: 0.0.40
codegen_flags: <defaults>
</compile_context>

<pallas_src>
import jax
import jax.numpy as jnp
from jax import lax
from jax.experimental import pallas as pl
from jax.experimental.pallas import tpu as pltpu


# ---------------------------------------------------------------------------
# helpers
# ---------------------------------------------------------------------------
def _round_up(x, m):
    return ((x + m - 1) // m) * m


def _pad_batch(x, bp):
    if x.shape[0] == bp:
        return x
    return jnp.pad(x, [(0, bp - x.shape[0])] + [(0, 0)] * (x.ndim - 1))


def _vmem_budget_and_limit():
    """Generation-aware VMEM sizing (v5e/v6e: 128 MiB physical, v7x: 64 MiB)."""
    cap = None
    try:
        cap = getattr(pltpu.get_tpu_info(), "vmem_capacity_bytes", None)
    except Exception:
        cap = None
    if not cap:
        cap = 64 * 1024 * 1024  # conservative (v7x-sized) fallback
    budget = min(cap // 2, 64 * 1024 * 1024)        # used for tile sizing
    limit = min(int(cap * 3 // 4), 96 * 1024 * 1024)  # scoped-VMEM limit
    return budget, limit


def _choose_batch_tile(B, L, S, T, ctx_itemsize, vmem_budget):
    """Pick a batch tile that fits VMEM.  Accounts for the double-buffered ctx
    block AND ~2 f32 elementwise temporaries (ctx*target, e*ctx) per row."""
    # Resident weights: the pipeliner allocates 2 buffers per input by default.
    w_bytes = 2 * ctx_itemsize * (T * S + S * T + T * T)
    per_row = (2 * ctx_itemsize + 2 * 4) * L * S          # ctx (x2) + f32 temps (x2)
    per_row += 2 * ctx_itemsize * T + 2 * 4 * (T + L)     # ti block + h/attn out blocks
    tb = (vmem_budget - w_bytes) // max(per_row, 1)
    tb = int(max(8, min(tb, 512)))
    if B >= 16:
        # keep >= 2 grid steps so the "parallel" batch axis can shard across
        # v7x's 2 TensorCores (and the pipeline has something to overlap).
        tb = min(tb, max(8, (((B + 1) // 2) // 8) * 8))
    if tb >= B:
        return B                      # one full-batch tile (full-dim block, any B)
    tb = max(8, (tb // 8) * 8)        # block-shape rule: multiple of 8 when < B
    # Prefer a tile that divides B: avoids the per-call batch-pad HBM copy of ctx.
    if B % 8 == 0:
        for cand in range(tb, 7, -8):
            if B % cand == 0:
                return cand
    return tb


# ---------------------------------------------------------------------------
# one-time weight preparation (hoisted out of the per-call path)
# ---------------------------------------------------------------------------
def prepare_soft_dot_weights(w1, w2, dtype=None):
    """w1: fc1.weight (S, T); w2: fc2.weight (T, S+T).
    Returns pre-transposed, MXU-ready operands (optionally cast, e.g. bf16):
      w1t  (T, S): fc1(ti)           == ti @ w1t
      w2st (S, T): weighted-ctx part of fc2
      w2tt (T, T): target-input part of fc2
    """
    S, T = w1.shape
    assert w2.shape == (T, S + T), "fc2 weight must be (T, S+T)"
    if dtype is not None:
        w1 = w1.astype(dtype)
        w2 = w2.astype(dtype)
    return w1.T, w2[:, :S].T, w2[:, S:].T


# ---------------------------------------------------------------------------
# kernel
# ---------------------------------------------------------------------------
def _soft_dot_attention_kernel(ti_ref, ctx_ref, w1t_ref, w2st_ref, w2tt_ref,
                               h_ref, attn_ref):
    f32 = jnp.float32
    hp = lax.Precision.HIGHEST

    ti = ti_ref[...]                         # (TB, T) in stream dtype (f32 or bf16)
    ctx = ctx_ref[...].astype(f32)           # (TB, L, S) -> f32 for score/softmax math

    # fc1: target = ti @ W1.T  (weight already transposed -> no in-kernel .T)
    target = jnp.dot(ti, w1t_ref[...],
                     preferred_element_type=f32, precision=hp)        # (TB, S) f32

    # scores[b, l] = <ctx[b, l, :], target[b, :]>  (VPU multiply + lane reduce)
    scores = jnp.sum(ctx * target[:, None, :], axis=-1)               # (TB, L) f32

    # Stable softmax over source length; EXACT normalization (correctness fix).
    m = jnp.max(scores, axis=-1, keepdims=True)
    e = jnp.exp(scores - m)
    denom = jnp.sum(e, axis=-1, keepdims=True)
    inv = 1.0 / denom                                                 # exact divide
    attn = e * inv
    attn_ref[...] = attn.astype(attn_ref.dtype)

    # Weighted context from the UNNORMALIZED weights, rescaled once by 1/denom
    # (scales S values per row instead of L attention weights).
    weighted = jnp.sum(e[:, :, None] * ctx, axis=1) * inv             # (TB, S) f32

    # fc2 on concat([weighted, ti]) == two matmuls on pre-split, pre-transposed weights.
    h = jnp.tanh(
        jnp.dot(weighted.astype(w2st_ref.dtype), w2st_ref[...],
                preferred_element_type=f32, precision=hp)
        + jnp.dot(ti, w2tt_ref[...], preferred_element_type=f32, precision=hp)
    )
    h_ref[...] = h.astype(h_ref.dtype)
    # TODO(synk): for very large sourceL, add an L grid axis ("arbitrary", last)
    # with online-softmax accumulators so the (TB, L, S) slab need not be resident.


# ---------------------------------------------------------------------------
# wrapper
# ---------------------------------------------------------------------------
def soft_dot_attention(target_input, ctx, w1t, w2st, w2tt):
    """target_input: (B, T); ctx: (B, L, S); weights from prepare_soft_dot_weights().
    Returns (h_tilde (B, T), attn (B, L))."""
    B, T = target_input.shape
    Bc, L, S = ctx.shape
    assert Bc == B
    assert w1t.shape == (T, S) and w2st.shape == (S, T) and w2tt.shape == (T, T)

    ctx_itemsize = jnp.dtype(ctx.dtype).itemsize
    vmem_budget, vmem_limit = _vmem_budget_and_limit()
    TB = _choose_batch_tile(B, L, S, T, ctx_itemsize, vmem_budget)

    if B % TB:
        # Rare path (batch not divisible by the tile): pads ctx -> one HBM copy.
        Bp = _round_up(B, TB)
        target_input = _pad_batch(target_input, Bp)
        ctx = _pad_batch(ctx, Bp)
    else:
        Bp = B

    h_p, attn_p = pl.pallas_call(
        _soft_dot_attention_kernel,
        out_shape=(
            jax.ShapeDtypeStruct((Bp, T), target_input.dtype),
            jax.ShapeDtypeStruct((Bp, L), jnp.float32),
        ),
        grid_spec=pltpu.PrefetchScalarGridSpec(
            num_scalar_prefetch=0,
            grid=(Bp // TB,),
            in_specs=[
                pl.BlockSpec((TB, T), lambda i: (i, 0)),       # target_input tile
                pl.BlockSpec((TB, L, S), lambda i: (i, 0, 0)),  # ctx tile (streamed)
                # Constant index_map -> VMEM-resident weights across grid steps.
                # (pipeline_mode=pl.Buffered(1) would reclaim their 2nd buffer;
                #  omitted here since the weights are small relative to ctx.)
                pl.BlockSpec((T, S), lambda i: (0, 0)),
                pl.BlockSpec((S, T), lambda i: (0, 0)),
                pl.BlockSpec((T, T), lambda i: (0, 0)),
            ],
            out_specs=(
                pl.BlockSpec((TB, T), lambda i: (i, 0)),
                pl.BlockSpec((TB, L), lambda i: (i, 0)),
            ),
        ),
        compiler_params=pltpu.CompilerParams(
            dimension_semantics=("parallel",),
            vmem_limit_bytes=vmem_limit,
        ),
    )(target_input, ctx, w1t, w2st, w2tt)

    return h_p[:B], attn_p[:B]


# ---------------------------------------------------------------------------
# pure-JAX reference (mirrors the PyTorch forward; HIGHEST precision to match
# the exact-f32 in-kernel math)
# ---------------------------------------------------------------------------
def _reference(target_input, ctx, w1, w2):
    hp = lax.Precision.HIGHEST
    target = jnp.dot(target_input, w1.T, precision=hp)                    # (B, S)
    scores = jnp.einsum("bls,bs->bl", ctx, target, precision=hp)          # (B, L)
    attn = jax.nn.softmax(scores, axis=-1)
    weighted = jnp.einsum("bl,bls->bs", attn, ctx, precision=hp)          # (B, S)
    h = jnp.tanh(jnp.dot(jnp.concatenate([weighted, target_input], axis=1),
                         w2.T, precision=hp))
    return h, attn


if __name__ == "__main__":
    B, L = 2, 8
    target_dim, source_dim = 32, 48

    key = jax.random.PRNGKey(0)
    k1, k2, k3, k4 = jax.random.split(key, 4)

    # Module parameters (nn.Linear weight shapes, no bias).
    w1 = jax.random.normal(k1, (source_dim, target_dim), jnp.float32) * 0.1
    w2 = jax.random.normal(k2, (target_dim, source_dim + target_dim), jnp.float32) * 0.1

    # Inputs: PyTorch's (B, target_dim, 1) flattened to (B, target_dim).
    target_input = jax.random.normal(k3, (B, target_dim), jnp.float32)
    ctx = jax.random.normal(k4, (B, L, source_dim), jnp.float32)

    h_ref, attn_ref = _reference(target_input, ctx, w1, w2)

    attn_fn = jax.jit(soft_dot_attention)

    # ---- f32 path: tight check (exact softmax normalization, HIGHEST dots) ----
    w1t, w2st, w2tt = prepare_soft_dot_weights(w1, w2)
    h, attn = attn_fn(target_input, ctx, w1t, w2st, w2tt)
    jax.block_until_ready((h, attn))
    assert jnp.allclose(h, h_ref, atol=1e-4, rtol=1e-4), \
        float(jnp.max(jnp.abs(h - h_ref)))
    assert jnp.allclose(attn, attn_ref, atol=1e-4, rtol=1e-4), \
        float(jnp.max(jnp.abs(attn - attn_ref)))
    assert jnp.allclose(jnp.sum(attn, axis=-1), 1.0, atol=1e-5)

    # ---- bf16 streaming path (halves ctx HBM bytes; f32 softmax math inside) ----
    w1t_b, w2st_b, w2tt_b = prepare_soft_dot_weights(w1, w2, dtype=jnp.bfloat16)
    h_b, attn_b = attn_fn(target_input.astype(jnp.bfloat16),
                          ctx.astype(jnp.bfloat16), w1t_b, w2st_b, w2tt_b)
    jax.block_until_ready((h_b, attn_b))
    assert jnp.allclose(h_b.astype(jnp.float32), h_ref, atol=8e-2, rtol=8e-2), \
        float(jnp.max(jnp.abs(h_b.astype(jnp.float32) - h_ref)))
    assert jnp.allclose(attn_b, attn_ref, atol=8e-2, rtol=8e-2), \
        float(jnp.max(jnp.abs(attn_b - attn_ref)))

    print("KERNEL_OK")
</pallas_src>

<mosaic_0001>
module attributes {stable_mosaic.version = 11 : i64} {
  func.func @_soft_dot_attention_kernel(%arg0: i32, %arg1: memref<2x32xf32, #tpu.memory_space<vmem>>, %arg2: memref<2x8x48xf32, #tpu.memory_space<vmem>>, %arg3: memref<32x48xf32, #tpu.memory_space<vmem>>, %arg4: memref<48x32xf32, #tpu.memory_space<vmem>>, %arg5: memref<32x32xf32, #tpu.memory_space<vmem>>, %arg6: memref<2x32xf32, #tpu.memory_space<vmem>>, %arg7: memref<2x8xf32, #tpu.memory_space<vmem>>) attributes {dimension_semantics = [#tpu.dimension_semantics<parallel>], iteration_bounds = array<i64: 1>, scalar_prefetch = 0 : i64, scratch_operands = 0 : i64, tpu.core_type = #tpu.core_type<tc>, window_params = [{transform_indices = @transform_0, window_bounds = array<i64: 2, 32>}, {transform_indices = @transform_1, window_bounds = array<i64: 2, 8, 48>}, {pipeline_mode = #tpu.pipeline_mode<synchronous>, transform_indices = @transform_2, window_bounds = array<i64: 32, 48>}, {pipeline_mode = #tpu.pipeline_mode<synchronous>, transform_indices = @transform_3, window_bounds = array<i64: 48, 32>}, {pipeline_mode = #tpu.pipeline_mode<synchronous>, transform_indices = @transform_4, window_bounds = array<i64: 32, 32>}, {transform_indices = @transform_5, window_bounds = array<i64: 2, 32>}, {transform_indices = @transform_6, window_bounds = array<i64: 2, 8>}]} {
    %c0 = arith.constant 0 : index
    %c0_0 = arith.constant 0 : index
    %0 = vector.load %arg1[%c0, %c0_0] : memref<2x32xf32, #tpu.memory_space<vmem>>, vector<2x32xf32>
    %c0_1 = arith.constant 0 : index
    %c0_2 = arith.constant 0 : index
    %c0_3 = arith.constant 0 : index
    %1 = vector.load %arg2[%c0_1, %c0_2, %c0_3] : memref<2x8x48xf32, #tpu.memory_space<vmem>>, vector<2x8x48xf32>
    %c0_4 = arith.constant 0 : index
    %c0_5 = arith.constant 0 : index
    %2 = vector.load %arg3[%c0_4, %c0_5] : memref<32x48xf32, #tpu.memory_space<vmem>>, vector<32x48xf32>
    %cst = arith.constant dense<0.000000e+00> : vector<2x48xf32>
    %3 = tpu.matmul %0, %2, %cst {dimension_numbers = #tpu.dot_dimension_numbers<[1], [0], [0], [1], [0, 0, 1, 1], [], []>, precision = #tpu.contract_precision<fp32>} : vector<2x32xf32>, vector<32x48xf32>, vector<2x48xf32> -> vector<2x48xf32>
    %4 = vector.shape_cast %3 : vector<2x48xf32> to vector<2x1x48xf32>
    %5 = vector.broadcast %4 : vector<2x1x48xf32> to vector<2x8x48xf32>
    %6 = arith.mulf %1, %5 : vector<2x8x48xf32>
    %cst_6 = arith.constant dense<0.000000e+00> : vector<2x8xf32>
    %7 = vector.multi_reduction <add>, %6, %cst_6 [2] : vector<2x8x48xf32> to vector<2x8xf32>
    %cst_7 = arith.constant dense<0xFF800000> : vector<2xf32>
    %8 = vector.multi_reduction <maximumf>, %7, %cst_7 [1] : vector<2x8xf32> to vector<2xf32>
    %9 = vector.shape_cast %8 : vector<2xf32> to vector<2x1xf32>
    %10 = vector.broadcast %9 : vector<2x1xf32> to vector<2x8xf32>
    %11 = arith.subf %7, %10 : vector<2x8xf32>
    %12 = math.exp %11 : vector<2x8xf32>
    %cst_8 = arith.constant dense<0.000000e+00> : vector<2xf32>
    %13 = vector.multi_reduction <add>, %12, %cst_8 [1] : vector<2x8xf32> to vector<2xf32>
    %14 = vector.shape_cast %13 : vector<2xf32> to vector<2x1xf32>
    %cst_9 = arith.constant 1.000000e+00 : f32
    %15 = vector.broadcast %cst_9 : f32 to vector<2x1xf32>
    %16 = arith.divf %15, %14 : vector<2x1xf32>
    %17 = vector.broadcast %16 : vector<2x1xf32> to vector<2x8xf32>
    %18 = arith.mulf %12, %17 : vector<2x8xf32>
    %c0_10 = arith.constant 0 : index
    %c0_11 = arith.constant 0 : index
    %19 = vector.load %arg7[%c0_10, %c0_11] : memref<2x8xf32, #tpu.memory_space<vmem>>, vector<2x8xf32>
    tpu.vector_store %arg7[%c0_10, %c0_11], %18 {strides = array<i32>} : memref<2x8xf32, #tpu.memory_space<vmem>>, vector<2x8xf32>,
    %20 = vector.shape_cast %12 : vector<2x8xf32> to vector<2x8x1xf32>
    %21 = vector.broadcast %20 : vector<2x8x1xf32> to vector<2x8x48xf32>
    %22 = arith.mulf %21, %1 : vector<2x8x48xf32>
    %cst_12 = arith.constant dense<0.000000e+00> : vector<2x48xf32>
    %23 = vector.multi_reduction <add>, %22, %cst_12 [1] : vector<2x8x48xf32> to vector<2x48xf32>
    %24 = vector.broadcast %16 : vector<2x1xf32> to vector<2x48xf32>
    %25 = arith.mulf %23, %24 : vector<2x48xf32>
    %c0_13 = arith.constant 0 : index
    %c0_14 = arith.constant 0 : index
    %26 = vector.load %arg4[%c0_13, %c0_14] : memref<48x32xf32, #tpu.memory_space<vmem>>, vector<48x32xf32>
    %cst_15 = arith.constant dense<0.000000e+00> : vector<2x32xf32>
    %27 = tpu.matmul %25, %26, %cst_15 {dimension_numbers = #tpu.dot_dimension_numbers<[1], [0], [0], [1], [0, 0, 1, 1], [], []>, precision = #tpu.contract_precision<fp32>} : vector<2x48xf32>, vector<48x32xf32>, vector<2x32xf32> -> vector<2x32xf32>
    %c0_16 = arith.constant 0 : index
    %c0_17 = arith.constant 0 : index
    %28 = vector.load %arg5[%c0_16, %c0_17] : memref<32x32xf32, #tpu.memory_space<vmem>>, vector<32x32xf32>
    %cst_18 = arith.constant dense<0.000000e+00> : vector<2x32xf32>
    %29 = tpu.matmul %0, %28, %cst_18 {dimension_numbers = #tpu.dot_dimension_numbers<[1], [0], [0], [1], [0, 0, 1, 1], [], []>, precision = #tpu.contract_precision<fp32>} : vector<2x32xf32>, vector<32x32xf32>, vector<2x32xf32> -> vector<2x32xf32>
    %30 = arith.addf %27, %29 : vector<2x32xf32>
    %31 = math.tanh %30 : vector<2x32xf32>
    %c0_19 = arith.constant 0 : index
    %c0_20 = arith.constant 0 : index
    %32 = vector.load %arg6[%c0_19, %c0_20] : memref<2x32xf32, #tpu.memory_space<vmem>>, vector<2x32xf32>
    tpu.vector_store %arg6[%c0_19, %c0_20], %31 {strides = array<i32>} : memref<2x32xf32, #tpu.memory_space<vmem>>, vector<2x32xf32>,
    return
  }
  func.func @transform_0(%arg0: i32) -> (i32, i32) {
    %c0_i32 = arith.constant 0 : i32
    %c0_i32_0 = arith.constant 0 : i32
    return %arg0, %c0_i32 : i32, i32
  }
  func.func @transform_1(%arg0: i32) -> (i32, i32, i32) {
    %c0_i32 = arith.constant 0 : i32
    %c0_i32_0 = arith.constant 0 : i32
    %c0_i32_1 = arith.constant 0 : i32
    return %arg0, %c0_i32, %c0_i32_0 : i32, i32, i32
  }
  func.func @transform_2(%arg0: i32) -> (i32, i32) {
    %c0_i32 = arith.constant 0 : i32
    %c0_i32_0 = arith.constant 0 : i32
    %c0_i32_1 = arith.constant 0 : i32
    return %c0_i32, %c0_i32_0 : i32, i32
  }
  func.func @transform_3(%arg0: i32) -> (i32, i32) {
    %c0_i32 = arith.constant 0 : i32
    %c0_i32_0 = arith.constant 0 : i32
    %c0_i32_1 = arith.constant 0 : i32
    return %c0_i32, %c0_i32_0 : i32, i32
  }
  func.func @transform_4(%arg0: i32) -> (i32, i32) {
    %c0_i32 = arith.constant 0 : i32
    %c0_i32_0 = arith.constant 0 : i32
    %c0_i32_1 = arith.constant 0 : i32
    return %c0_i32, %c0_i32_0 : i32, i32
  }
  func.func @transform_5(%arg0: i32) -> (i32, i32) {
    %c0_i32 = arith.constant 0 : i32
    %c0_i32_0 = arith.constant 0 : i32
    return %arg0, %c0_i32 : i32, i32
  }
  func.func @transform_6(%arg0: i32) -> (i32, i32) {
    %c0_i32 = arith.constant 0 : i32
    %c0_i32_0 = arith.constant 0 : i32
    return %arg0, %c0_i32 : i32, i32
  }
}

</mosaic_0001>

<llo_original>
// kernel: soft_dot_attention.1
$region0: #{soft_dot_attention.1}
  #allocation0 [shape = 'u32[]', space=smem, size = 0x4, offset = 0x4, fixed_abs, tag = 'smem constant byte address 0x4 - core index']
  #allocation1 [shape = 'u32[72,128]{1,0:T(1,128)}', space=vmem, size = 0x9000, scoped, tag = 'internal scratch']
  %s0 = inlined_call_operand.hbm [shape: f32[2,32], index: 0, kind: input, shape index: {}]
  %s1 = inlined_call_operand.vmem [shape: f32[2,8,48], index: 1, kind: input, shape index: {}]
  %s2 = inlined_call_operand.vmem [shape: f32[32,48], index: 2, kind: input, shape index: {}]
  %s3 = inlined_call_operand.vmem [shape: f32[48,32], index: 3, kind: input, shape index: {}]
  %s4 = inlined_call_operand.vmem [shape: f32[32,32], index: 4, kind: input, shape index: {}]
  %s5 = inlined_call_operand.hbm [shape: f32[2,32], index: 5, kind: output, shape index: {0}]
  %s6 = inlined_call_operand.hbm [shape: f32[2,8], index: 6, kind: output, shape index: {1}]
  %7 = xla_tuple %s5, %s6
  %s8 = sld [smem:[#allocation0]]
  $region42: #{soft_dot_attention.1} parent=0
    _
  %s10 = ssub.s32 1, %s8
  %s11 = scalar_select 0, %s10, %s8
  $region1: #{soft_dot_attention.1} parent=0
    #allocation2 [shape = 'u8[1024]{0}', space=vmem, size = 0x400, scoped, tag = 'input window, operand 0, single buffered']
    #allocation3 [shape = 's32[1]{0}', space=sflag, size = 0x4, scoped, tag = 'scoped memory for soft_dot_attention.1']
    #allocation4 [shape = 's32[1]{0}', space=sflag, size = 0x4, scoped, tag = 'scoped memory for soft_dot_attention.1']
    #allocation5 [shape = 'u8[1024]{0}', space=vmem, size = 0x400, scoped, tag = 'output window, operand 0, single buffered']
    #allocation6 [shape = 'u8[1024]{0}', space=vmem, size = 0x400, scoped, tag = 'output window, operand 1, single buffered']
    #allocation7 [shape = 's32[1]{0}', space=sflag, size = 0x4, scoped, tag = 'scoped memory for soft_dot_attention.1']
    %12 = vsyncpa [#allocation3], 0
    %13 = vsyncpa [#allocation4], 0
    %14 = vsyncpa [#allocation7], 0
    // Predicated region
    $region2: #{soft_dot_attention.1} parent=1 // pred_check
      _
    $region3: #{soft_dot_attention.1} parent=1 // pred_check_branch
      %16 = sbr.rel (0) target = $region5
    $region4: #{soft_dot_attention.1} parent=1 // pred_region
      %18 = vsyncadd [#allocation3], 0
      %s20 = sshll.u32 %s0, 4
      %s21 = int_to_ptr.hbm [resolvable:$true] %s20
      %s22 = sshll.u32 [#allocation2], 4
      %s23 = int_to_ptr.vmem [resolvable:$true] %s22
      %25 = dma.hbm_to_vmem [thread:$0]  %s21, 32, %s23, [#allocation3]
    $region5: #{soft_dot_attention.1} parent=1 // pred_fallthru
      _
    // Predicated region
    $region6: #{soft_dot_attention.1} parent=1 // pred_check
      _
    $region7: #{soft_dot_attention.1} parent=1 // pred_check_branch
      %27 = sbr.rel (0) target = $region9
    $region8: #{soft_dot_attention.1} parent=1 // pred_region
      _
    $region9: #{soft_dot_attention.1} parent=1 // pred_fallthru
      _
    // Predicated region
    $region10: #{soft_dot_attention.1} parent=1 // pred_check
      _
    $region11: #{soft_dot_attention.1} parent=1 // pred_check_branch
      %29 = sbr.rel (0) target = $region13
    $region12: #{soft_dot_attention.1} parent=1 // pred_region
      _
    $region13: #{soft_dot_attention.1} parent=1 // pred_fallthru
      _
    // Predicated region
    $region14: #{soft_dot_attention.1} parent=1 // pred_check
      _
    $region15: #{soft_dot_attention.1} parent=1 // pred_check_branch
      %31 = sbr.rel (0) target = $region17
    $region16: #{soft_dot_attention.1} parent=1 // pred_region
      _
    $region17: #{soft_dot_attention.1} parent=1 // pred_fallthru
      _
    // Predicated region
    $region18: #{soft_dot_attention.1} parent=1 // pred_check
      _
    $region19: #{soft_dot_attention.1} parent=1 // pred_check_branch
      %33 = sbr.rel (0) target = $region21
    $region20: #{soft_dot_attention.1} parent=1 // pred_region
      _
    $region21: #{soft_dot_attention.1} parent=1 // pred_fallthru
      _
    // Predicated region
    $region22: #{soft_dot_attention.1} parent=1 // pred_check
      _
    $region23: #{soft_dot_attention.1} parent=1 // pred_check_branch
      %35 = sbr.rel (0) target = $region25
    $region24: #{soft_dot_attention.1} parent=1 // pred_region
      %37 = dma.done [#allocation3], 32
    $region25: #{soft_dot_attention.1} parent=1 // pred_fallthru
      _
    %v38 = vld [vmem:[#allocation2] sm:$0x3]
    %v39 = vld [vmem:[%s1] sm:$0xff]
    %v40 = vld [vmem:[%s1 + $0x8] sm:$0xff]
    %v41 = vld [vmem:[%s2] sm:$0xff]
    %v42 = vld [vmem:[%s2 + $0x8] sm:$0xff]
    %v43 = vld [vmem:[%s2 + $0x10] sm:$0xff]
    %v44 = vld [vmem:[%s2 + $0x18] sm:$0xff]
    %vm45 = vcmask 261120
    %v47 = vsel %vm45, %v38, 0
    %49 = vmatpush.msra.mxu0 0.0
    %50 = vmatpush.msra.mxu0 0.0
    %51 = vmatpush.msra.mxu0 0.0
    %52 = vmatpush.msra.mxu0 0.0
    %53 = vmatpush.msra.mxu0 0.0
    %54 = vmatpush.msra.mxu0 0.0
    %55 = vmatpush.msra.mxu0 0.0
    %56 = vmatpush.msra.mxu0 0.0
    %57 = vmatpush.msra.mxu0 0.0
    %58 = vmatpush.msra.mxu0 0.0
    %59 = vmatpush.msra.mxu0 0.0
    %60 = vmatpush.msra.mxu0 0.0
    %v61 = vand.u32 %v44, 4294901760
    %62 = vmatpush.msra.mxu0 %v61
    %v63 = vand.u32 %v43, 4294901760
    %64 = vmatpush.msra.mxu0 %v63
    %v65 = vand.u32 %v42, 4294901760
    %66 = vmatpush.msra.mxu0 %v65
    %v67 = vand.u32 %v41, 4294901760
    %68 = vmatpush.msra.mxu0 %v67
    %v69 = vand.u32 %v47, 4294901760
    %v70 = vsub.f32 %v47, %v69
    %v71 = vand.u32 %v70, 4294901760
    %v72 = vsub.f32 %v70, %v71
    %v73 = vand.u32 %v72, 4294901760
    %74 = vmatmul.f32.gmra.mxu0 %v73
    %v75 = vpop.f32.mrf.mxu0
    %v76 = vadd.f32 0.0, %v75
    %77 = vdwg.mxu0
    %78 = vmatpush.msra.mxu0 0.0
    %79 = vmatpush.msra.mxu0 0.0
    %80 = vmatpush.msra.mxu0 0.0
    %81 = vmatpush.msra.mxu0 0.0
    %82 = vmatpush.msra.mxu0 0.0
    %83 = vmatpush.msra.mxu0 0.0
    %84 = vmatpush.msra.mxu0 0.0
    %85 = vmatpush.msra.mxu0 0.0
    %86 = vmatpush.msra.mxu0 0.0
    %87 = vmatpush.msra.mxu0 0.0
    %88 = vmatpush.msra.mxu0 0.0
    %89 = vmatpush.msra.mxu0 0.0
    %v90 = vand.u32 %v44, 4294901760
    %v91 = vsub.f32 %v44, %v90
    %v92 = vand.u32 %v91, 4294901760
    %v93 = vsub.f32 %v91, %v92
    %v94 = vand.u32 %v93, 4294901760
    %95 = vmatpush.msra.mxu0 %v94
    %v96 = vand.u32 %v43, 4294901760
    %v97 = vsub.f32 %v43, %v96
    %v98 = vand.u32 %v97, 4294901760
    %v99 = vsub.f32 %v97, %v98
    %v100 = vand.u32 %v99, 4294901760
    %101 = vmatpush.msra.mxu0 %v100
    %v102 = vand.u32 %v42, 4294901760
    %v103 = vsub.f32 %v42, %v102
    %v104 = vand.u32 %v103, 4294901760
    %v105 = vsub.f32 %v103, %v104
    %v106 = vand.u32 %v105, 4294901760
    %107 = vmatpush.msra.mxu0 %v106
    %v108 = vand.u32 %v41, 4294901760
    %v109 = vsub.f32 %v41, %v108
    %v110 = vand.u32 %v109, 4294901760
    %v111 = vsub.f32 %v109, %v110
    %v112 = vand.u32 %v111, 4294901760
    %113 = vmatpush.msra.mxu0 %v112
    %v114 = vand.u32 %v47, 4294901760
    %115 = vmatmul.f32.gmra.mxu0 %v114
    %v116 = vpop.f32.mrf.mxu0
    %v117 = vadd.f32 %v76, %v116
    %118 = vdwg.mxu0
    %119 = vmatpush.msra.mxu0 0.0
    %120 = vmatpush.msra.mxu0 0.0
    %121 = vmatpush.msra.mxu0 0.0
    %122 = vmatpush.msra.mxu0 0.0
    %123 = vmatpush.msra.mxu0 0.0
    %124 = vmatpush.msra.mxu0 0.0
    %125 = vmatpush.msra.mxu0 0.0
    %126 = vmatpush.msra.mxu0 0.0
    %127 = vmatpush.msra.mxu0 0.0
    %128 = vmatpush.msra.mxu0 0.0
    %129 = vmatpush.msra.mxu0 0.0
    %130 = vmatpush.msra.mxu0 0.0
    %v131 = vand.u32 %v44, 4294901760
    %v132 = vsub.f32 %v44, %v131
    %133 = vmatpush.msra.mxu0 %v132
    %v134 = vand.u32 %v43, 4294901760
    %v135 = vsub.f32 %v43, %v134
    %136 = vmatpush.msra.mxu0 %v135
    %v137 = vand.u32 %v42, 4294901760
    %v138 = vsub.f32 %v42, %v137
    %139 = vmatpush.msra.mxu0 %v138
    %v140 = vand.u32 %v41, 4294901760
    %v141 = vsub.f32 %v41, %v140
    %142 = vmatpush.msra.mxu0 %v141
    %v143 = vand.u32 %v47, 4294901760
    %v144 = vsub.f32 %v47, %v143
    %145 = vmatmul.f32.gmra.mxu0 %v144
    %v146 = vpop.f32.mrf.mxu0
    %v147 = vadd.f32 %v117, %v146
    %148 = vdwg.mxu0
    %149 = vmatpush.msra.mxu0 0.0
    %150 = vmatpush.msra.mxu0 0.0
    %151 = vmatpush.msra.mxu0 0.0
    %152 = vmatpush.msra.mxu0 0.0
    %153 = vmatpush.msra.mxu0 0.0
    %154 = vmatpush.msra.mxu0 0.0
    %155 = vmatpush.msra.mxu0 0.0
    %156 = vmatpush.msra.mxu0 0.0
    %157 = vmatpush.msra.mxu0 0.0
    %158 = vmatpush.msra.mxu0 0.0
    %159 = vmatpush.msra.mxu0 0.0
    %160 = vmatpush.msra.mxu0 0.0
    %v161 = vand.u32 %v44, 4294901760
    %162 = vmatpush.msra.mxu0 %v161
    %v163 = vand.u32 %v43, 4294901760
    %164 = vmatpush.msra.mxu0 %v163
    %v165 = vand.u32 %v42, 4294901760
    %166 = vmatpush.msra.mxu0 %v165
    %v167 = vand.u32 %v41, 4294901760
    %168 = vmatpush.msra.mxu0 %v167
    %v169 = vand.u32 %v47, 4294901760
    %v170 = vsub.f32 %v47, %v169
    %v171 = vand.u32 %v170, 4294901760
    %172 = vmatmul.f32.gmra.mxu0 %v171
    %v173 = vpop.f32.mrf.mxu0
    %v174 = vadd.f32 %v147, %v173
    %175 = vdwg.mxu0
    %176 = vmatpush.msra.mxu0 0.0
    %177 = vmatpush.msra.mxu0 0.0
    %178 = vmatpush.msra.mxu0 0.0
    %179 = vmatpush.msra.mxu0 0.0
    %180 = vmatpush.msra.mxu0 0.0
    %181 = vmatpush.msra.mxu0 0.0
    %182 = vmatpush.msra.mxu0 0.0
    %183 = vmatpush.msra.mxu0 0.0
    %184 = vmatpush.msra.mxu0 0.0
    %185 = vmatpush.msra.mxu0 0.0
    %186 = vmatpush.msra.mxu0 0.0
    %187 = vmatpush.msra.mxu0 0.0
    %v188 = vand.u32 %v44, 4294901760
    %v189 = vsub.f32 %v44, %v188
    %v190 = vand.u32 %v189, 4294901760
    %191 = vmatpush.msra.mxu0 %v190
    %v192 = vand.u32 %v43, 4294901760
    %v193 = vsub.f32 %v43, %v192
    %v194 = vand.u32 %v193, 4294901760
    %195 = vmatpush.msra.mxu0 %v194
    %v196 = vand.u32 %v42, 4294901760
    %v197 = vsub.f32 %v42, %v196
    %v198 = vand.u32 %v197, 4294901760
    %199 = vmatpush.msra.mxu0 %v198
    %v200 = vand.u32 %v41, 4294901760
    %v201 = vsub.f32 %v41, %v200
    %v202 = vand.u32 %v201, 4294901760
    %203 = vmatpush.msra.mxu0 %v202
    %v204 = vand.u32 %v47, 4294901760
    %205 = vmatmul.f32.gmra.mxu0 %v204
    %v206 = vpop.f32.mrf.mxu0
    %v207 = vadd.f32 %v174, %v206
    %208 = vdwg.mxu0
    %209 = vmatpush.msra.mxu0 0.0
    %210 = vmatpush.msra.mxu0 0.0
    %211 = vmatpush.msra.mxu0 0.0
    %212 = vmatpush.msra.mxu0 0.0
    %213 = vmatpush.msra.mxu0 0.0
    %214 = vmatpush.msra.mxu0 0.0
    %215 = vmatpush.msra.mxu0 0.0
    %216 = vmatpush.msra.mxu0 0.0
    %217 = vmatpush.msra.mxu0 0.0
    %218 = vmatpush.msra.mxu0 0.0
    %219 = vmatpush.msra.mxu0 0.0
    %220 = vmatpush.msra.mxu0 0.0
    %v221 = vand.u32 %v44, 4294901760
    %222 = vmatpush.msra.mxu0 %v221
    %v223 = vand.u32 %v43, 4294901760
    %224 = vmatpush.msra.mxu0 %v223
    %v225 = vand.u32 %v42, 4294901760
    %226 = vmatpush.msra.mxu0 %v225
    %v227 = vand.u32 %v41, 4294901760
    %228 = vmatpush.msra.mxu0 %v227
    %v229 = vand.u32 %v47, 4294901760
    %230 = vmatmul.f32.gmra.mxu0 %v229
    %v231 = vpop.f32.mrf.mxu0
    %v232 = vadd.f32 %v207, %v231
    %233 = vdwg.mxu0
    %v235 = vrot.slane %v232, 1
    %v236 = vperm.slane %v232, 0
    %v237 = vperm.slane %v235, 0
    %v240 = vmul.f32 %v39, %v236
    %v241 = vmul.f32 %v40, %v237
    %vm242 = vcmask 392192
    %v243 = vsel %vm242, %v240, 0.0
    %244 = vadd.xlane.f32.xlu0 %v243
    %v245 = vpop.xlane.xlu0 %244
    %v246 = vsel %vm242, %v241, 0.0
    %247 = vadd.xlane.f32.xlu0 %v246
    %v248 = vpop.xlane.xlu0 %247
    %v251 = vlaneseq
    %v252 = vand.u32 %v251, 127
    %v253 = vperm.slane %v245, %v252
    %v254 = vperm.slane %v248, %v252
    %vm255 = vcmask 1041409
    %v256 = vsel %vm255, %v254, %v253
    %vm258 = vcmask 58368
    %v259 = vsel %vm258, %v256, -inf
    %260 = vmax.xlane.f32.xlu0 %v259
    %v261 = vpop.xlane.xlu0 %260
    %v263 = vperm.slane %v261, 0
    %v264 = vperm.slane %v261, 1
    %v267 = vsub.f32 %v245, %v263
    %v268 = vsub.f32 %v248, %v264
    %v269 = vmul.f32 %v267, 1.442695
    %v270 = vpow.pop %v269
    %v271 = vmul.f32 %v268, 1.442695
    %v272 = vpow.pop %v271
    %275 = vset.pattern.permute.xlu0 0
    %276 = vperm.xlu0 %275, %v270
    %v277 = vpop.permute.xlu0 %276
    %278 = vset.pattern.permute.xlu0 0
    %279 = vperm.xlu0 %278, %v272
    %v280 = vpop.permute.xlu0 %279
    %v281 = vperm.slane %v277, %v252
    %v282 = vperm.slane %v280, %v252
    %v283 = vsel %vm255, %v282, %v281
    %v285 = vsel %vm258, %v283, 0.0
    %286 = vadd.xlane.f32.xlu0 %v285
    %v287 = vpop.xlane.xlu0 %286
    %v288 = vrcp.pop %v287
    %v289 = vmul.f32 %v287, %v288
    %v290 = vsub.f32 1.0, %v289
    %v291 = vmul.f32 %v288, %v290
    %v292 = vadd.f32 %v288, %v291
    %vm293 = vweird.f32 %v287
    %vm294 = vweird.f32 %v288
    %vm295 = vmor %vm293, %vm294
    %v296 = vsel %vm295, %v288, %v292
    %v297 = vand.u32 2147483647, %v287
    %vm298 = vcmp.eq.f32.partialorder %v297, 8.507059e+37
    %v299 = vand.u32 %v287, 2147483648
    %v300 = vor.u32 1.1754944e-38, %v299
    %v301 = vsel %vm298, %v300, %v296
    %v302 = vmul.f32 1.0, %v301
    %v304 = vperm.slane %v302, 0
    %v305 = vperm.slane %v302, 1
    %v308 = vmul.f32 %v270, %v304
    %v309 = vmul.f32 %v272, %v305
    %312 = vset.pattern.permute.xlu0 0
    %313 = vperm.xlu0 %312, %v308
    %v314 = vpop.permute.xlu0 %313
    %315 = vset.pattern.permute.xlu0 0
    %316 = vperm.xlu0 %315, %v309
    %v317 = vpop.permute.xlu0 %316
    %v318 = vperm.slane %v314, %v252
    %v319 = vperm.slane %v317, %v252
    %v320 = vsel %vm255, %v319, %v318
    %322 = vst.msk [vmem:[#allocation6] sm:$0x3] %vm258, %v320
    %v325 = vmul.f32 %v277, %v39
    %v326 = vmul.f32 %v280, %v40
    %v327 = vsel %vm242, %v325, 0.0
    %v328 = vrot.slane %v327, 4
    %v329 = vadd.f32 %v327, %v328
    %v330 = vrot.slane %v329, 2
    %v331 = vadd.f32 %v329, %v330
    %v332 = vrot.slane %v331, 1
    %v333 = vadd.f32 %v331, %v332
    %v334 = vsel %vm242, %v326, 0.0
    %v335 = vrot.slane %v334, 4
    %v336 = vadd.f32 %v334, %v335
    %v337 = vrot.slane %v336, 2
    %v338 = vadd.f32 %v336, %v337
    %v339 = vrot.slane %v338, 1
    %v340 = vadd.f32 %v338, %v339
    %v341 = vrot.slane %v302, 1
    %v344 = vmul.f32 %v333, %v302
    %v345 = vmul.f32 %v340, %v341
    %v346 = vld [vmem:[%s3] sm:$0xff]
    %v347 = vld [vmem:[%s3 + $0x8] sm:$0xff]
    %v348 = vld [vmem:[%s3 + $0x10] sm:$0xff]
    %v349 = vld [vmem:[%s3 + $0x18] sm:$0xff]
    %v350 = vld [vmem:[%s3 + $0x20] sm:$0xff]
    %v351 = vld [vmem:[%s3 + $0x28] sm:$0xff]
    %v352 = vld [vmem:[%s4] sm:$0xff]
    %v353 = vld [vmem:[%s4 + $0x8] sm:$0xff]
    %v354 = vld [vmem:[%s4 + $0x10] sm:$0xff]
    %v355 = vld [vmem:[%s4 + $0x18] sm:$0xff]
    %356 = vmatpush.msra.mxu0 0.0
    %357 = vmatpush.msra.mxu0 0.0
    %358 = vmatpush.msra.mxu0 0.0
    %359 = vmatpush.msra.mxu0 0.0
    %360 = vmatpush.msra.mxu0 0.0
    %361 = vmatpush.msra.mxu0 0.0
    %362 = vmatpush.msra.mxu0 0.0
    %363 = vmatpush.msra.mxu0 0.0
    %364 = vmatpush.msra.mxu0 0.0
    %365 = vmatpush.msra.mxu0 0.0
    %366 = vmatpush.msra.mxu0 0.0
    %367 = vmatpush.msra.mxu0 0.0
    %v368 = vand.u32 %v355, 4294901760
    %369 = vmatpush.msra.mxu0 %v368
    %v370 = vand.u32 %v354, 4294901760
    %371 = vmatpush.msra.mxu0 %v370
    %v372 = vand.u32 %v353, 4294901760
    %373 = vmatpush.msra.mxu0 %v372
    %v374 = vand.u32 %v352, 4294901760
    %375 = vmatpush.msra.mxu0 %v374
    %v376 = vand.u32 %v47, 4294901760
    %v377 = vsub.f32 %v47, %v376
    %v378 = vand.u32 %v377, 4294901760
    %v379 = vsub.f32 %v377, %v378
    %v380 = vand.u32 %v379, 4294901760
    %381 = vmatmul.f32.gmra.mxu0 %v380
    %v382 = vpop.f32.mrf.mxu0
    %v383 = vadd.f32 0.0, %v382
    %384 = vdwg.mxu0
    %385 = vmatpush.msra.mxu0 0.0
    %386 = vmatpush.msra.mxu0 0.0
    %387 = vmatpush.msra.mxu0 0.0
    %388 = vmatpush.msra.mxu0 0.0
    %389 = vmatpush.msra.mxu0 0.0
    %390 = vmatpush.msra.mxu0 0.0
    %391 = vmatpush.msra.mxu0 0.0
    %392 = vmatpush.msra.mxu0 0.0
    %393 = vmatpush.msra.mxu0 0.0
    %394 = vmatpush.msra.mxu0 0.0
    %395 = vmatpush.msra.mxu0 0.0
    %396 = vmatpush.msra.mxu0 0.0
    %v397 = vand.u32 %v355, 4294901760
    %v398 = vsub.f32 %v355, %v397
    %v399 = vand.u32 %v398, 4294901760
    %v400 = vsub.f32 %v398, %v399
    %v401 = vand.u32 %v400, 4294901760
    %402 = vmatpush.msra.mxu0 %v401
    %v403 = vand.u32 %v354, 4294901760
    %v404 = vsub.f32 %v354, %v403
    %v405 = vand.u32 %v404, 4294901760
    %v406 = vsub.f32 %v404, %v405
    %v407 = vand.u32 %v406, 4294901760
    %408 = vmatpush.msra.mxu0 %v407
    %v409 = vand.u32 %v353, 4294901760
    %v410 = vsub.f32 %v353, %v409
    %v411 = vand.u32 %v410, 4294901760
    %v412 = vsub.f32 %v410, %v411
    %v413 = vand.u32 %v412, 4294901760
    %414 = vmatpush.msra.mxu0 %v413
    %v415 = vand.u32 %v352, 4294901760
    %v416 = vsub.f32 %v352, %v415
    %v417 = vand.u32 %v416, 4294901760
    %v418 = vsub.f32 %v416, %v417
    %v419 = vand.u32 %v418, 4294901760
    %420 = vmatpush.msra.mxu0 %v419
    %v421 = vand.u32 %v47, 4294901760
    %422 = vmatmul.f32.gmra.mxu0 %v421
    %v423 = vpop.f32.mrf.mxu0
    %v424 = vadd.f32 %v383, %v423
    %425 = vdwg.mxu0
    %426 = vmatpush.msra.mxu0 0.0
    %427 = vmatpush.msra.mxu0 0.0
    %428 = vmatpush.msra.mxu0 0.0
    %429 = vmatpush.msra.mxu0 0.0
    %430 = vmatpush.msra.mxu0 0.0
    %431 = vmatpush.msra.mxu0 0.0
    %432 = vmatpush.msra.mxu0 0.0
    %433 = vmatpush.msra.mxu0 0.0
    %434 = vmatpush.msra.mxu0 0.0
    %435 = vmatpush.msra.mxu0 0.0
    %436 = vmatpush.msra.mxu0 0.0
    %437 = vmatpush.msra.mxu0 0.0
    %v438 = vand.u32 %v355, 4294901760
    %v439 = vsub.f32 %v355, %v438
    %440 = vmatpush.msra.mxu0 %v439
    %v441 = vand.u32 %v354, 4294901760
    %v442 = vsub.f32 %v354, %v441
    %443 = vmatpush.msra.mxu0 %v442
    %v444 = vand.u32 %v353, 4294901760
    %v445 = vsub.f32 %v353, %v444
    %446 = vmatpush.msra.mxu0 %v445
    %v447 = vand.u32 %v352, 4294901760
    %v448 = vsub.f32 %v352, %v447
    %449 = vmatpush.msra.mxu0 %v448
    %v450 = vand.u32 %v47, 4294901760
    %v451 = vsub.f32 %v47, %v450
    %452 = vmatmul.f32.gmra.mxu0 %v451
    %v453 = vpop.f32.mrf.mxu0
    %v454 = vadd.f32 %v424, %v453
    %455 = vdwg.mxu0
    %456 = vmatpush.msra.mxu0 0.0
    %457 = vmatpush.msra.mxu0 0.0
    %458 = vmatpush.msra.mxu0 0.0
    %459 = vmatpush.msra.mxu0 0.0
    %460 = vmatpush.msra.mxu0 0.0
    %461 = vmatpush.msra.mxu0 0.0
    %462 = vmatpush.msra.mxu0 0.0
    %463 = vmatpush.msra.mxu0 0.0
    %464 = vmatpush.msra.mxu0 0.0
    %465 = vmatpush.msra.mxu0 0.0
    %466 = vmatpush.msra.mxu0 0.0
    %467 = vmatpush.msra.mxu0 0.0
    %v468 = vand.u32 %v355, 4294901760
    %469 = vmatpush.msra.mxu0 %v468
    %v470 = vand.u32 %v354, 4294901760
    %471 = vmatpush.msra.mxu0 %v470
    %v472 = vand.u32 %v353, 4294901760
    %473 = vmatpush.msra.mxu0 %v472
    %v474 = vand.u32 %v352, 4294901760
    %475 = vmatpush.msra.mxu0 %v474
    %v476 = vand.u32 %v47, 4294901760
    %v477 = vsub.f32 %v47, %v476
    %v478 = vand.u32 %v477, 4294901760
    %479 = vmatmul.f32.gmra.mxu0 %v478
    %v480 = vpop.f32.mrf.mxu0
    %v481 = vadd.f32 %v454, %v480
    %482 = vdwg.mxu0
    %483 = vmatpush.msra.mxu0 0.0
    %484 = vmatpush.msra.mxu0 0.0
    %485 = vmatpush.msra.mxu0 0.0
    %486 = vmatpush.msra.mxu0 0.0
    %487 = vmatpush.msra.mxu0 0.0
    %488 = vmatpush.msra.mxu0 0.0
    %489 = vmatpush.msra.mxu0 0.0
    %490 = vmatpush.msra.mxu0 0.0
    %491 = vmatpush.msra.mxu0 0.0
    %492 = vmatpush.msra.mxu0 0.0
    %493 = vmatpush.msra.mxu0 0.0
    %494 = vmatpush.msra.mxu0 0.0
    %v495 = vand.u32 %v355, 4294901760
    %v496 = vsub.f32 %v355, %v495
    %v497 = vand.u32 %v496, 4294901760
    %498 = vmatpush.msra.mxu0 %v497
    %v499 = vand.u32 %v354, 4294901760
    %v500 = vsub.f32 %v354, %v499
    %v501 = vand.u32 %v500, 4294901760
    %502 = vmatpush.msra.mxu0 %v501
    %v503 = vand.u32 %v353, 4294901760
    %v504 = vsub.f32 %v353, %v503
    %v505 = vand.u32 %v504, 4294901760
    %506 = vmatpush.msra.mxu0 %v505
    %v507 = vand.u32 %v352, 4294901760
    %v508 = vsub.f32 %v352, %v507
    %v509 = vand.u32 %v508, 4294901760
    %510 = vmatpush.msra.mxu0 %v509
    %v511 = vand.u32 %v47, 4294901760
    %512 = vmatmul.f32.gmra.mxu0 %v511
    %v513 = vpop.f32.mrf.mxu0
    %v514 = vadd.f32 %v481, %v513
    %515 = vdwg.mxu0
    %516 = vmatpush.msra.mxu0 0.0
    %517 = vmatpush.msra.mxu0 0.0
    %518 = vmatpush.msra.mxu0 0.0
    %519 = vmatpush.msra.mxu0 0.0
    %520 = vmatpush.msra.mxu0 0.0
    %521 = vmatpush.msra.mxu0 0.0
    %522 = vmatpush.msra.mxu0 0.0
    %523 = vmatpush.msra.mxu0 0.0
    %524 = vmatpush.msra.mxu0 0.0
    %525 = vmatpush.msra.mxu0 0.0
    %526 = vmatpush.msra.mxu0 0.0
    %527 = vmatpush.msra.mxu0 0.0
    %v528 = vand.u32 %v355, 4294901760
    %529 = vmatpush.msra.mxu0 %v528
    %v530 = vand.u32 %v354, 4294901760
    %531 = vmatpush.msra.mxu0 %v530
    %v532 = vand.u32 %v353, 4294901760
    %533 = vmatpush.msra.mxu0 %v532
    %v534 = vand.u32 %v352, 4294901760
    %535 = vmatpush.msra.mxu0 %v534
    %v536 = vand.u32 %v47, 4294901760
    %537 = vmatmul.f32.gmra.mxu0 %v536
    %v538 = vpop.f32.mrf.mxu0
    %v539 = vadd.f32 %v514, %v538
    %540 = vdwg.mxu0
    %v543 = vrot.slane %v345, 7
    %v544 = vsel %vm255, %v543, %v344
    %v545 = vsel %vm242, %v544, 0
    %547 = vmatpush.msra.mxu0 0.0
    %548 = vmatpush.msra.mxu0 0.0
    %549 = vmatpush.msra.mxu0 0.0
    %550 = vmatpush.msra.mxu0 0.0
    %551 = vmatpush.msra.mxu0 0.0
    %552 = vmatpush.msra.mxu0 0.0
    %553 = vmatpush.msra.mxu0 0.0
    %554 = vmatpush.msra.mxu0 0.0
    %555 = vmatpush.msra.mxu0 0.0
    %556 = vmatpush.msra.mxu0 0.0
    %v557 = vand.u32 %v351, 4294901760
    %558 = vmatpush.msra.mxu0 %v557
    %v559 = vand.u32 %v350, 4294901760
    %560 = vmatpush.msra.mxu0 %v559
    %v561 = vand.u32 %v349, 4294901760
    %562 = vmatpush.msra.mxu0 %v561
    %v563 = vand.u32 %v348, 4294901760
    %564 = vmatpush.msra.mxu0 %v563
    %v565 = vand.u32 %v347, 4294901760
    %566 = vmatpush.msra.mxu0 %v565
    %v567 = vand.u32 %v346, 4294901760
    %568 = vmatpush.msra.mxu0 %v567
    %v569 = vand.u32 %v545, 4294901760
    %v570 = vsub.f32 %v545, %v569
    %v571 = vand.u32 %v570, 4294901760
    %v572 = vsub.f32 %v570, %v571
    %v573 = vand.u32 %v572, 4294901760
    %574 = vmatmul.f32.gmra.mxu0 %v573
    %v575 = vpop.f32.mrf.mxu0
    %v576 = vadd.f32 %v539, %v575
    %577 = vdwg.mxu0
    %578 = vmatpush.msra.mxu0 0.0
    %579 = vmatpush.msra.mxu0 0.0
    %580 = vmatpush.msra.mxu0 0.0
    %581 = vmatpush.msra.mxu0 0.0
    %582 = vmatpush.msra.mxu0 0.0
    %583 = vmatpush.msra.mxu0 0.0
    %584 = vmatpush.msra.mxu0 0.0
    %585 = vmatpush.msra.mxu0 0.0
    %586 = vmatpush.msra.mxu0 0.0
    %587 = vmatpush.msra.mxu0 0.0
    %v588 = vand.u32 %v351, 4294901760
    %v589 = vsub.f32 %v351, %v588
    %v590 = vand.u32 %v589, 4294901760
    %v591 = vsub.f32 %v589, %v590
    %v592 = vand.u32 %v591, 4294901760
    %593 = vmatpush.msra.mxu0 %v592
    %v594 = vand.u32 %v350, 4294901760
    %v595 = vsub.f32 %v350, %v594
    %v596 = vand.u32 %v595, 4294901760
    %v597 = vsub.f32 %v595, %v596
    %v598 = vand.u32 %v597, 4294901760
    %599 = vmatpush.msra.mxu0 %v598
    %v600 = vand.u32 %v349, 4294901760
    %v601 = vsub.f32 %v349, %v600
    %v602 = vand.u32 %v601, 4294901760
    %v603 = vsub.f32 %v601, %v602
    %v604 = vand.u32 %v603, 4294901760
    %605 = vmatpush.msra.mxu0 %v604
    %v606 = vand.u32 %v348, 4294901760
    %v607 = vsub.f32 %v348, %v606
    %v608 = vand.u32 %v607, 4294901760
    %v609 = vsub.f32 %v607, %v608
    %v610 = vand.u32 %v609, 4294901760
    %611 = vmatpush.msra.mxu0 %v610
    %v612 = vand.u32 %v347, 4294901760
    %v613 = vsub.f32 %v347, %v612
    %v614 = vand.u32 %v613, 4294901760
    %v615 = vsub.f32 %v613, %v614
    %v616 = vand.u32 %v615, 4294901760
    %617 = vmatpush.msra.mxu0 %v616
    %v618 = vand.u32 %v346, 4294901760
    %v619 = vsub.f32 %v346, %v618
    %v620 = vand.u32 %v619, 4294901760
    %v621 = vsub.f32 %v619, %v620
    %v622 = vand.u32 %v621, 4294901760
    %623 = vmatpush.msra.mxu0 %v622
    %v624 = vand.u32 %v545, 4294901760
    %625 = vmatmul.f32.gmra.mxu0 %v624
    %v626 = vpop.f32.mrf.mxu0
    %v627 = vadd.f32 %v576, %v626
    %628 = vdwg.mxu0
    %629 = vmatpush.msra.mxu0 0.0
    %630 = vmatpush.msra.mxu0 0.0
    %631 = vmatpush.msra.mxu0 0.0
    %632 = vmatpush.msra.mxu0 0.0
    %633 = vmatpush.msra.mxu0 0.0
    %634 = vmatpush.msra.mxu0 0.0
    %635 = vmatpush.msra.mxu0 0.0
    %636 = vmatpush.msra.mxu0 0.0
    %637 = vmatpush.msra.mxu0 0.0
    %638 = vmatpush.msra.mxu0 0.0
    %v639 = vand.u32 %v351, 4294901760
    %v640 = vsub.f32 %v351, %v639
    %641 = vmatpush.msra.mxu0 %v640
    %v642 = vand.u32 %v350, 4294901760
    %v643 = vsub.f32 %v350, %v642
    %644 = vmatpush.msra.mxu0 %v643
    %v645 = vand.u32 %v349, 4294901760
    %v646 = vsub.f32 %v349, %v645
    %647 = vmatpush.msra.mxu0 %v646
    %v648 = vand.u32 %v348, 4294901760
    %v649 = vsub.f32 %v348, %v648
    %650 = vmatpush.msra.mxu0 %v649
    %v651 = vand.u32 %v347, 4294901760
    %v652 = vsub.f32 %v347, %v651
    %653 = vmatpush.msra.mxu0 %v652
    %v654 = vand.u32 %v346, 4294901760
    %v655 = vsub.f32 %v346, %v654
    %656 = vmatpush.msra.mxu0 %v655
    %v657 = vand.u32 %v545, 4294901760
    %v658 = vsub.f32 %v545, %v657
    %659 = vmatmul.f32.gmra.mxu0 %v658
    %v660 = vpop.f32.mrf.mxu0
    %v661 = vadd.f32 %v627, %v660
    %662 = vdwg.mxu0
    %663 = vmatpush.msra.mxu0 0.0
    %664 = vmatpush.msra.mxu0 0.0
    %665 = vmatpush.msra.mxu0 0.0
    %666 = vmatpush.msra.mxu0 0.0
    %667 = vmatpush.msra.mxu0 0.0
    %668 = vmatpush.msra.mxu0 0.0
    %669 = vmatpush.msra.mxu0 0.0
    %670 = vmatpush.msra.mxu0 0.0
    %671 = vmatpush.msra.mxu0 0.0
    %672 = vmatpush.msra.mxu0 0.0
    %v673 = vand.u32 %v351, 4294901760
    %674 = vmatpush.msra.mxu0 %v673
    %v675 = vand.u32 %v350, 4294901760
    %676 = vmatpush.msra.mxu0 %v675
    %v677 = vand.u32 %v349, 4294901760
    %678 = vmatpush.msra.mxu0 %v677
    %v679 = vand.u32 %v348, 4294901760
    %680 = vmatpush.msra.mxu0 %v679
    %v681 = vand.u32 %v347, 4294901760
    %682 = vmatpush.msra.mxu0 %v681
    %v683 = vand.u32 %v346, 4294901760
    %684 = vmatpush.msra.mxu0 %v683
    %v685 = vand.u32 %v545, 4294901760
    %v686 = vsub.f32 %v545, %v685
    %v687 = vand.u32 %v686, 4294901760
    %688 = vmatmul.f32.gmra.mxu0 %v687
    %v689 = vpop.f32.mrf.mxu0
    %v690 = vadd.f32 %v661, %v689
    %691 = vdwg.mxu0
    %692 = vmatpush.msra.mxu0 0.0
    %693 = vmatpush.msra.mxu0 0.0
    %694 = vmatpush.msra.mxu0 0.0
    %695 = vmatpush.msra.mxu0 0.0
    %696 = vmatpush.msra.mxu0 0.0
    %697 = vmatpush.msra.mxu0 0.0
    %698 = vmatpush.msra.mxu0 0.0
    %699 = vmatpush.msra.mxu0 0.0
    %700 = vmatpush.msra.mxu0 0.0
    %701 = vmatpush.msra.mxu0 0.0
    %v702 = vand.u32 %v351, 4294901760
    %v703 = vsub.f32 %v351, %v702
    %v704 = vand.u32 %v703, 4294901760
    %705 = vmatpush.msra.mxu0 %v704
    %v706 = vand.u32 %v350, 4294901760
    %v707 = vsub.f32 %v350, %v706
    %v708 = vand.u32 %v707, 4294901760
    %709 = vmatpush.msra.mxu0 %v708
    %v710 = vand.u32 %v349, 4294901760
    %v711 = vsub.f32 %v349, %v710
    %v712 = vand.u32 %v711, 4294901760
    %713 = vmatpush.msra.mxu0 %v712
    %v714 = vand.u32 %v348, 4294901760
    %v715 = vsub.f32 %v348, %v714
    %v716 = vand.u32 %v715, 4294901760
    %717 = vmatpush.msra.mxu0 %v716
    %v718 = vand.u32 %v347, 4294901760
    %v719 = vsub.f32 %v347, %v718
    %v720 = vand.u32 %v719, 4294901760
    %721 = vmatpush.msra.mxu0 %v720
    %v722 = vand.u32 %v346, 4294901760
    %v723 = vsub.f32 %v346, %v722
    %v724 = vand.u32 %v723, 4294901760
    %725 = vmatpush.msra.mxu0 %v724
    %v726 = vand.u32 %v545, 4294901760
    %727 = vmatmul.f32.gmra.mxu0 %v726
    %v728 = vpop.f32.mrf.mxu0
    %v729 = vadd.f32 %v690, %v728
    %730 = vdwg.mxu0
    %731 = vmatpush.msra.mxu0 0.0
    %732 = vmatpush.msra.mxu0 0.0
    %733 = vmatpush.msra.mxu0 0.0
    %734 = vmatpush.msra.mxu0 0.0
    %735 = vmatpush.msra.mxu0 0.0
    %736 = vmatpush.msra.mxu0 0.0
    %737 = vmatpush.msra.mxu0 0.0
    %738 = vmatpush.msra.mxu0 0.0
    %739 = vmatpush.msra.mxu0 0.0
    %740 = vmatpush.msra.mxu0 0.0
    %v741 = vand.u32 %v351, 4294901760
    %742 = vmatpush.msra.mxu0 %v741
    %v743 = vand.u32 %v350, 4294901760
    %744 = vmatpush.msra.mxu0 %v743
    %v745 = vand.u32 %v349, 4294901760
    %746 = vmatpush.msra.mxu0 %v745
    %v747 = vand.u32 %v348, 4294901760
    %748 = vmatpush.msra.mxu0 %v747
    %v749 = vand.u32 %v347, 4294901760
    %750 = vmatpush.msra.mxu0 %v749
    %v751 = vand.u32 %v346, 4294901760
    %752 = vmatpush.msra.mxu0 %v751
    %v753 = vand.u32 %v545, 4294901760
    %754 = vmatmul.f32.gmra.mxu0 %v753
    %v755 = vpop.f32.mrf.mxu0
    %v756 = vadd.f32 %v729, %v755
    %757 = vdwg.mxu0
    %v758 = vtanh.pop %v756
    %vm759 = vcmask 254976
    %760 = vst.msk [vmem:[#allocation5] sm:$0x3] %vm759, %v758
    // Predicated region
    $region26: #{soft_dot_attention.1} parent=1 // pred_check
      _
    $region27: #{soft_dot_attention.1} parent=1 // pred_check_branch
      %762 = sbr.rel (0) target = $region29
    $region28: #{soft_dot_attention.1} parent=1 // pred_region
      %764 = vsyncadd [#allocation4], 0
      %s766 = sshll.u32 [#allocation5], 4
      %s767 = int_to_ptr.vmem [resolvable:$true] %s766
      %s768 = sshll.u32 %s5, 4
      %s769 = int_to_ptr.hbm [resolvable:$true] %s768
      %771 = dma.vmem_to_hbm [thread:$0]  %s767, 32, %s769, [#allocation4]
    $region29: #{soft_dot_attention.1} parent=1 // pred_fallthru
      _
    // Predicated region
    $region30: #{soft_dot_attention.1} parent=1 // pred_check
      _
    $region31: #{soft_dot_attention.1} parent=1 // pred_check_branch
      %773 = sbr.rel (0) target = $region33
    $region32: #{soft_dot_attention.1} parent=1 // pred_region
      %775 = vsyncadd [#allocation7], 0
      %s777 = sshll.u32 [#allocation6], 4
      %s778 = int_to_ptr.vmem [resolvable:$true] %s777
      %s779 = sshll.u32 %s6, 4
      %s780 = int_to_ptr.hbm [resolvable:$true] %s779
      %782 = dma.vmem_to_hbm [thread:$0]  %s778, 32, %s780, [#allocation7]
    $region33: #{soft_dot_attention.1} parent=1 // pred_fallthru
      _
    // Predicated region
    $region34: #{soft_dot_attention.1} parent=1 // pred_check
      _
    $region35: #{soft_dot_attention.1} parent=1 // pred_check_branch
      %784 = sbr.rel (0) target = $region37
    $region36: #{soft_dot_attention.1} parent=1 // pred_region
      %786 = dma.done [#allocation4], 32
    $region37: #{soft_dot_attention.1} parent=1 // pred_fallthru
      _
    // Predicated region
    $region38: #{soft_dot_attention.1} parent=1 // pred_check
      _
    $region39: #{soft_dot_attention.1} parent=1 // pred_check_branch
      %788 = sbr.rel (0) target = $region41
    $region40: #{soft_dot_attention.1} parent=1 // pred_region
      %790 = dma.done [#allocation7], 32
    $region41: #{soft_dot_attention.1} parent=1 // pred_fallthru
      _
    %791 = vsyncpa [#allocation3], 1
    %792 = vsyncpa [#allocation4], 1
    %793 = vsyncpa [#allocation7], 1

</llo_original>
